<compile_context>
chip_gen: v5e
topology: v5e:2x2
jax: 0.10.0
libtpu: 0.0.40
codegen_flags: <defaults>
</compile_context>

<pallas_src>
import functools

import jax
import jax.numpy as jnp
from jax.experimental import pallas as pl
from jax.experimental.pallas import tpu as pltpu


def _round_up(x, m):
    return ((x + m - 1) // m) * m


def _mlp_kernel(n_layers, use_bf16, x_ref, *refs):
    """Fused MLP forward on one batch tile.

    refs = (w0_ref, b0_ref, w1_ref, b1_ref, ..., out_ref)
    tanh after every layer except the last (activation_tag='tanh').
    Weights are pre-transposed to [in, out]; biases are [1, out].
    """
    out_ref = refs[-1]
    param_refs = refs[:-1]

    h = x_ref[...]  # f32
    for layer in range(n_layers):
        w = param_refs[2 * layer][...]
        b = param_refs[2 * layer + 1][...]
        if use_bf16:
            # MXU-friendly inputs; accumulate in f32, bias/tanh in f32.
            lhs = h.astype(jnp.bfloat16)
            rhs = w.astype(jnp.bfloat16)
        else:
            lhs, rhs = h, w
        h = jnp.dot(lhs, rhs, preferred_element_type=jnp.float32) + b
        if layer != n_layers - 1:
            h = jnp.tanh(h)
    out_ref[...] = h.astype(out_ref.dtype)


def prepare_params(params):
    """One-time glue: transpose weights to [in, out], reshape biases to [1, out].

    Args:
      params: list of (weight [out, in], bias [out]) in PyTorch layout.
    Returns:
      flat list [w0, b0, w1, b1, ...] in kernel layout (float32).
    """
    flat = []
    for w, b in params:
        flat.append(jnp.asarray(w, jnp.float32).T)            # [in, out]
        flat.append(jnp.asarray(b, jnp.float32).reshape(1, -1))  # [1, out]
    return flat


def _vmem_cap_bytes():
    """Generation-aware scoped-VMEM cap: half the physical VMEM, >=16 MiB."""
    try:
        cap = int(pltpu.get_tpu_info().vmem_capacity_bytes) // 2
    except Exception:
        cap = 32 * 1024 * 1024
    return max(cap, 16 * 1024 * 1024)


def nonlinear_network_forward(x, flat_params, *, tile_b=4096, use_bf16=False):
    """Run the fused MLP Pallas kernel.

    Args:
      x: [batch, in_feature] float32.
      flat_params: output of prepare_params(params).
      tile_b: batch tile size (rows per grid step); clamped to the batch and
        shrunk so the batch grid has >=2 steps when possible (v7x megacore).
      use_bf16: opt-in bf16 MXU path (looser tolerance, ~1e-2).

    Returns:
      [batch, out_feature] float32.
    """
    n_layers = len(flat_params) // 2
    batch, in_feature = x.shape
    out_feature = flat_params[-1].shape[-1]

    # Tile must be a multiple of 8 sublanes; no wrapper-side batch padding —
    # Pallas masks the edge block (rows are independent, OOB writes dropped).
    tile_b = max(8, _round_up(min(tile_b, batch), 8))
    if batch > 8:
        # Ensure at least 2 grid steps so the "parallel" axis spans both
        # TensorCores on v7x; no-op cost on v5e/v6e.
        tile_b = min(tile_b, _round_up(pl.cdiv(batch, 2), 8))
    grid = (pl.cdiv(batch, tile_b),)

    # x/out stream per-tile; weights/biases use constant index_maps and stay
    # VMEM-resident. Bind ndim via a default arg — no late binding.
    in_specs = [pl.BlockSpec((tile_b, in_feature), lambda i: (i, 0))]
    in_specs += [
        pl.BlockSpec(p.shape, lambda i, nd=p.ndim: (0,) * nd)
        for p in flat_params
    ]
    out_spec = pl.BlockSpec((tile_b, out_feature), lambda i: (i, 0))

    # Scoped-VMEM budget using the real (8,128)-tiled layout: any buffer with
    # last dim <= 128 occupies a full 128-lane tile.
    lane = 128
    max_mid = max(int(w.shape[-1]) for w in flat_params[0::2])
    io_bytes = 2 * tile_b * (_round_up(in_feature, lane)
                             + _round_up(out_feature, lane)) * 4  # dbl-buffered x/out
    act_bytes = 3 * tile_b * _round_up(max_mid, lane) * 4          # live temporaries
    param_bytes = sum(
        _round_up(int(p.shape[0]), 8) * _round_up(int(p.shape[-1]), lane) * 4
        for p in flat_params)
    vmem_limit = int(1.5 * (io_bytes + act_bytes + param_bytes))
    vmem_limit = max(vmem_limit, 8 * 1024 * 1024)
    vmem_limit = min(vmem_limit, _vmem_cap_bytes())

    out = pl.pallas_call(
        functools.partial(_mlp_kernel, n_layers, use_bf16),
        out_shape=jax.ShapeDtypeStruct((batch, out_feature), jnp.float32),
        grid=grid,
        in_specs=in_specs,
        out_specs=out_spec,
        compiler_params=pltpu.CompilerParams(
            dimension_semantics=("parallel",),
            vmem_limit_bytes=vmem_limit,
        ),
    )(x, *flat_params)

    return out


def init_params(key, in_feature, out_feature, n_hidden=1, n_neuron=40):
    """Deterministic init mimicking torch.nn.Linear's uniform(-1/sqrt(fan_in), ...)."""
    dims = [in_feature] + [n_neuron] * (n_hidden + 1) + [out_feature]
    params = []
    for i in range(len(dims) - 1):
        fan_in, fan_out = dims[i], dims[i + 1]
        key, kw, kb = jax.random.split(key, 3)
        bound = 1.0 / jnp.sqrt(jnp.float32(fan_in))
        w = jax.random.uniform(kw, (fan_out, fan_in), jnp.float32, -bound, bound)
        b = jax.random.uniform(kb, (fan_out,), jnp.float32, -bound, bound)
        params.append((w, b))
    return params


def reference_forward(x, params):
    """Pure-JAX reference identical to the PyTorch forward."""
    h = x
    for i, (w, b) in enumerate(params):
        h = h @ w.T + b
        if i != len(params) - 1:
            h = jnp.tanh(h)
    return h


if __name__ == "__main__":
    # TODO(synk): fit/test/load (Adam training, MSELoss, torch.load) are host-side
    # training utilities with no Pallas-forward equivalent; only forward() is
    # implemented.
    in_feature, out_feature = 4, 2
    n_hidden, n_neuron = 1, 40

    key = jax.random.PRNGKey(0)
    key, kp = jax.random.split(key)
    params = init_params(kp, in_feature, out_feature, n_hidden, n_neuron)
    prepared = prepare_params(params)  # one-time transpose / reshape

    # Case 1: tiny batch (single grid step).
    key, kx1 = jax.random.split(key)
    x1 = jax.random.normal(kx1, (8, in_feature), jnp.float32)
    out1 = jax.block_until_ready(nonlinear_network_forward(x1, prepared))
    ref1 = reference_forward(x1, params)
    assert out1.shape == (8, out_feature)
    assert jnp.allclose(out1, ref1, atol=1e-5, rtol=1e-5), "mismatch (case 1)"

    # Case 2: batch that does not divide the tile — exercises the masked edge
    # block and the >=2-grid-step (v7x megacore) path.
    key, kx2 = jax.random.split(key)
    x2 = jax.random.normal(kx2, (200, in_feature), jnp.float32)
    out2 = jax.block_until_ready(nonlinear_network_forward(x2, prepared))
    ref2 = reference_forward(x2, params)
    assert out2.shape == (200, out_feature)
    assert jnp.allclose(out2, ref2, atol=1e-5, rtol=1e-5), "mismatch (case 2)"

    print("KERNEL_OK")
</pallas_src>

<mosaic_0001>
module attributes {stable_mosaic.version = 11 : i64} {
  func.func @_mlp_kernel(%arg0: i32, %arg1: memref<8x4xf32, #tpu.memory_space<vmem>>, %arg2: memref<4x40xf32, #tpu.memory_space<vmem>>, %arg3: memref<1x40xf32, #tpu.memory_space<vmem>>, %arg4: memref<40x40xf32, #tpu.memory_space<vmem>>, %arg5: memref<1x40xf32, #tpu.memory_space<vmem>>, %arg6: memref<40x2xf32, #tpu.memory_space<vmem>>, %arg7: memref<1x2xf32, #tpu.memory_space<vmem>>, %arg8: memref<8x2xf32, #tpu.memory_space<vmem>>) attributes {dimension_semantics = [#tpu.dimension_semantics<parallel>], iteration_bounds = array<i64: 1>, scalar_prefetch = 0 : i64, scratch_operands = 0 : i64, tpu.core_type = #tpu.core_type<tc>, window_params = [{transform_indices = @transform_0, window_bounds = array<i64: 8, 4>}, {pipeline_mode = #tpu.pipeline_mode<synchronous>, transform_indices = @transform_1, window_bounds = array<i64: 4, 40>}, {pipeline_mode = #tpu.pipeline_mode<synchronous>, transform_indices = @transform_2, window_bounds = array<i64: 1, 40>}, {pipeline_mode = #tpu.pipeline_mode<synchronous>, transform_indices = @transform_3, window_bounds = array<i64: 40, 40>}, {pipeline_mode = #tpu.pipeline_mode<synchronous>, transform_indices = @transform_4, window_bounds = array<i64: 1, 40>}, {pipeline_mode = #tpu.pipeline_mode<synchronous>, transform_indices = @transform_5, window_bounds = array<i64: 40, 2>}, {pipeline_mode = #tpu.pipeline_mode<synchronous>, transform_indices = @transform_6, window_bounds = array<i64: 1, 2>}, {transform_indices = @transform_7, window_bounds = array<i64: 8, 2>}]} {
    %c0 = arith.constant 0 : index
    %c0_0 = arith.constant 0 : index
    %0 = vector.load %arg1[%c0, %c0_0] : memref<8x4xf32, #tpu.memory_space<vmem>>, vector<8x4xf32>
    %c0_1 = arith.constant 0 : index
    %c0_2 = arith.constant 0 : index
    %1 = vector.load %arg2[%c0_1, %c0_2] : memref<4x40xf32, #tpu.memory_space<vmem>>, vector<4x40xf32>
    %c0_3 = arith.constant 0 : index
    %c0_4 = arith.constant 0 : index
    %2 = vector.load %arg3[%c0_3, %c0_4] : memref<1x40xf32, #tpu.memory_space<vmem>>, vector<1x40xf32>
    %cst = arith.constant dense<0.000000e+00> : vector<8x40xf32>
    %3 = tpu.matmul %0, %1, %cst {dimension_numbers = #tpu.dot_dimension_numbers<[1], [0], [0], [1], [0, 0, 1, 1], [], []>} : vector<8x4xf32>, vector<4x40xf32>, vector<8x40xf32> -> vector<8x40xf32>
    %4 = vector.broadcast %2 : vector<1x40xf32> to vector<8x40xf32>
    %5 = arith.addf %3, %4 : vector<8x40xf32>
    %6 = math.tanh %5 : vector<8x40xf32>
    %c0_5 = arith.constant 0 : index
    %c0_6 = arith.constant 0 : index
    %7 = vector.load %arg4[%c0_5, %c0_6] : memref<40x40xf32, #tpu.memory_space<vmem>>, vector<40x40xf32>
    %c0_7 = arith.constant 0 : index
    %c0_8 = arith.constant 0 : index
    %8 = vector.load %arg5[%c0_7, %c0_8] : memref<1x40xf32, #tpu.memory_space<vmem>>, vector<1x40xf32>
    %cst_9 = arith.constant dense<0.000000e+00> : vector<8x40xf32>
    %9 = tpu.matmul %6, %7, %cst_9 {dimension_numbers = #tpu.dot_dimension_numbers<[1], [0], [0], [1], [0, 0, 1, 1], [], []>} : vector<8x40xf32>, vector<40x40xf32>, vector<8x40xf32> -> vector<8x40xf32>
    %10 = vector.broadcast %8 : vector<1x40xf32> to vector<8x40xf32>
    %11 = arith.addf %9, %10 : vector<8x40xf32>
    %12 = math.tanh %11 : vector<8x40xf32>
    %c0_10 = arith.constant 0 : index
    %c0_11 = arith.constant 0 : index
    %13 = vector.load %arg6[%c0_10, %c0_11] : memref<40x2xf32, #tpu.memory_space<vmem>>, vector<40x2xf32>
    %c0_12 = arith.constant 0 : index
    %c0_13 = arith.constant 0 : index
    %14 = vector.load %arg7[%c0_12, %c0_13] : memref<1x2xf32, #tpu.memory_space<vmem>>, vector<1x2xf32>
    %cst_14 = arith.constant dense<0.000000e+00> : vector<8x2xf32>
    %15 = tpu.matmul %12, %13, %cst_14 {dimension_numbers = #tpu.dot_dimension_numbers<[1], [0], [0], [1], [0, 0, 1, 1], [], []>} : vector<8x40xf32>, vector<40x2xf32>, vector<8x2xf32> -> vector<8x2xf32>
    %16 = vector.broadcast %14 : vector<1x2xf32> to vector<8x2xf32>
    %17 = arith.addf %15, %16 : vector<8x2xf32>
    %c0_15 = arith.constant 0 : index
    %c0_16 = arith.constant 0 : index
    %18 = vector.load %arg8[%c0_15, %c0_16] : memref<8x2xf32, #tpu.memory_space<vmem>>, vector<8x2xf32>
    tpu.vector_store %arg8[%c0_15, %c0_16], %17 {strides = array<i32>} : memref<8x2xf32, #tpu.memory_space<vmem>>, vector<8x2xf32>,
    return
  }
  func.func @transform_0(%arg0: i32) -> (i32, i32) {
    %c0_i32 = arith.constant 0 : i32
    %c0_i32_0 = arith.constant 0 : i32
    return %arg0, %c0_i32 : i32, i32
  }
  func.func @transform_1(%arg0: i32) -> (i32, i32) {
    %c0_i32 = arith.constant 0 : i32
    %c0_i32_0 = arith.constant 0 : i32
    %c0_i32_1 = arith.constant 0 : i32
    return %c0_i32, %c0_i32_0 : i32, i32
  }
  func.func @transform_2(%arg0: i32) -> (i32, i32) {
    %c0_i32 = arith.constant 0 : i32
    %c0_i32_0 = arith.constant 0 : i32
    %c0_i32_1 = arith.constant 0 : i32
    return %c0_i32, %c0_i32_0 : i32, i32
  }
  func.func @transform_3(%arg0: i32) -> (i32, i32) {
    %c0_i32 = arith.constant 0 : i32
    %c0_i32_0 = arith.constant 0 : i32
    %c0_i32_1 = arith.constant 0 : i32
    return %c0_i32, %c0_i32_0 : i32, i32
  }
  func.func @transform_4(%arg0: i32) -> (i32, i32) {
    %c0_i32 = arith.constant 0 : i32
    %c0_i32_0 = arith.constant 0 : i32
    %c0_i32_1 = arith.constant 0 : i32
    return %c0_i32, %c0_i32_0 : i32, i32
  }
  func.func @transform_5(%arg0: i32) -> (i32, i32) {
    %c0_i32 = arith.constant 0 : i32
    %c0_i32_0 = arith.constant 0 : i32
    %c0_i32_1 = arith.constant 0 : i32
    return %c0_i32, %c0_i32_0 : i32, i32
  }
  func.func @transform_6(%arg0: i32) -> (i32, i32) {
    %c0_i32 = arith.constant 0 : i32
    %c0_i32_0 = arith.constant 0 : i32
    %c0_i32_1 = arith.constant 0 : i32
    return %c0_i32, %c0_i32_0 : i32, i32
  }
  func.func @transform_7(%arg0: i32) -> (i32, i32) {
    %c0_i32 = arith.constant 0 : i32
    %c0_i32_0 = arith.constant 0 : i32
    return %arg0, %c0_i32 : i32, i32
  }
}

</mosaic_0001>

<llo_original>
// kernel: tpu_custom_call.1
$region0: #{tpu_custom_call.1}
  #allocation0 [shape = 'u32[]', space=smem, size = 0x4, offset = 0x4, fixed_abs, tag = 'smem constant byte address 0x4 - core index']
  #allocation1 [shape = 'u32[72,128]{1,0:T(1,128)}', space=vmem, size = 0x9000, scoped, tag = 'internal scratch']
  %s0 = inlined_call_operand.vmem [shape: f32[8,4], index: 0, kind: input, shape index: {}]
  %s1 = inlined_call_operand.vmem [shape: f32[4,40], index: 1, kind: input, shape index: {}]
  %s2 = inlined_call_operand.vmem [shape: f32[1,40], index: 2, kind: input, shape index: {}]
  %s3 = inlined_call_operand.vmem [shape: f32[40,40], index: 3, kind: input, shape index: {}]
  %s4 = inlined_call_operand.vmem [shape: f32[1,40], index: 4, kind: input, shape index: {}]
  %s5 = inlined_call_operand.vmem [shape: f32[40,2], index: 5, kind: input, shape index: {}]
  %s6 = inlined_call_operand.vmem [shape: f32[1,2], index: 6, kind: input, shape index: {}]
  %s7 = inlined_call_operand.vmem [shape: f32[8,2], index: 7, kind: output, shape index: {}]
  %s8 = sld [smem:[#allocation0]]
  $region38: #{tpu_custom_call.1} parent=0
    _
  %s10 = ssub.s32 1, %s8
  %s11 = scalar_select 0, %s10, %s8
  // Predicated region
  $region2: #{tpu_custom_call.1} parent=0 // pred_check
    _
  $region3: #{tpu_custom_call.1} parent=0 // pred_check_branch
    %13 = sbr.rel (0) target = $region5
  $region4: #{tpu_custom_call.1} parent=0 // pred_region
    _
  $region5: #{tpu_custom_call.1} parent=0 // pred_fallthru
    _
  // Predicated region
  $region6: #{tpu_custom_call.1} parent=0 // pred_check
    _
  $region7: #{tpu_custom_call.1} parent=0 // pred_check_branch
    %15 = sbr.rel (0) target = $region9
  $region8: #{tpu_custom_call.1} parent=0 // pred_region
    _
  $region9: #{tpu_custom_call.1} parent=0 // pred_fallthru
    _
  // Predicated region
  $region10: #{tpu_custom_call.1} parent=0 // pred_check
    _
  $region11: #{tpu_custom_call.1} parent=0 // pred_check_branch
    %17 = sbr.rel (0) target = $region13
  $region12: #{tpu_custom_call.1} parent=0 // pred_region
    _
  $region13: #{tpu_custom_call.1} parent=0 // pred_fallthru
    _
  // Predicated region
  $region14: #{tpu_custom_call.1} parent=0 // pred_check
    _
  $region15: #{tpu_custom_call.1} parent=0 // pred_check_branch
    %19 = sbr.rel (0) target = $region17
  $region16: #{tpu_custom_call.1} parent=0 // pred_region
    _
  $region17: #{tpu_custom_call.1} parent=0 // pred_fallthru
    _
  // Predicated region
  $region18: #{tpu_custom_call.1} parent=0 // pred_check
    _
  $region19: #{tpu_custom_call.1} parent=0 // pred_check_branch
    %21 = sbr.rel (0) target = $region21
  $region20: #{tpu_custom_call.1} parent=0 // pred_region
    _
  $region21: #{tpu_custom_call.1} parent=0 // pred_fallthru
    _
  // Predicated region
  $region22: #{tpu_custom_call.1} parent=0 // pred_check
    _
  $region23: #{tpu_custom_call.1} parent=0 // pred_check_branch
    %23 = sbr.rel (0) target = $region25
  $region24: #{tpu_custom_call.1} parent=0 // pred_region
    _
  $region25: #{tpu_custom_call.1} parent=0 // pred_fallthru
    _
  // Predicated region
  $region26: #{tpu_custom_call.1} parent=0 // pred_check
    _
  $region27: #{tpu_custom_call.1} parent=0 // pred_check_branch
    %25 = sbr.rel (0) target = $region29
  $region28: #{tpu_custom_call.1} parent=0 // pred_region
    _
  $region29: #{tpu_custom_call.1} parent=0 // pred_fallthru
    _
  %v26 = vld [vmem:[%s0] sm:$0xff]
  %v27 = vld [vmem:[%s1] sm:$0xf]
  %v28 = vld [vmem:[%s2] sm:$0x1]
  %v30 = vperm.slane %v28, 0
  %vm32 = vcmask 31744
  %v34 = vsel %vm32, %v26, 0
  %vm36 = vcmask 1043456
  %v38 = vsel %vm36, %v27, 0
  %40 = vmatpush.msra.mxu0 0.0
  %41 = vmatpush.msra.mxu0 0.0
  %42 = vmatpush.msra.mxu0 0.0
  %43 = vmatpush.msra.mxu0 0.0
  %44 = vmatpush.msra.mxu0 0.0
  %45 = vmatpush.msra.mxu0 0.0
  %46 = vmatpush.msra.mxu0 0.0
  %47 = vmatpush.msra.mxu0 0.0
  %48 = vmatpush.msra.mxu0 0.0
  %49 = vmatpush.msra.mxu0 0.0
  %50 = vmatpush.msra.mxu0 0.0
  %51 = vmatpush.msra.mxu0 0.0
  %52 = vmatpush.msra.mxu0 0.0
  %53 = vmatpush.msra.mxu0 0.0
  %54 = vmatpush.msra.mxu0 0.0
  %55 = vmatpush.msra.mxu0 %v38
  %56 = vmatmul.f32.gmra.mxu0 %v34
  %v57 = vpop.f32.mrf.mxu0
  %v58 = vadd.f32 %v30, %v57
  %59 = vdwg.mxu0
  %v60 = vtanh.pop %v58
  %v61 = vld [vmem:[%s3] sm:$0xff]
  %v62 = vld [vmem:[%s3 + $0x8] sm:$0xff]
  %v63 = vld [vmem:[%s3 + $0x10] sm:$0xff]
  %v64 = vld [vmem:[%s3 + $0x18] sm:$0xff]
  %v65 = vld [vmem:[%s3 + $0x20] sm:$0xff]
  %v66 = vld [vmem:[%s4] sm:$0x1]
  %v68 = vperm.slane %v66, 0
  %vm70 = vcmask 326656
  %v72 = vsel %vm70, %v60, 0
  %74 = vmatpush.msra.mxu0 0.0
  %75 = vmatpush.msra.mxu0 0.0
  %76 = vmatpush.msra.mxu0 0.0
  %77 = vmatpush.msra.mxu0 0.0
  %78 = vmatpush.msra.mxu0 0.0
  %79 = vmatpush.msra.mxu0 0.0
  %80 = vmatpush.msra.mxu0 0.0
  %81 = vmatpush.msra.mxu0 0.0
  %82 = vmatpush.msra.mxu0 0.0
  %83 = vmatpush.msra.mxu0 0.0
  %84 = vmatpush.msra.mxu0 0.0
  %85 = vmatpush.msra.mxu0 %v65
  %86 = vmatpush.msra.mxu0 %v64
  %87 = vmatpush.msra.mxu0 %v63
  %88 = vmatpush.msra.mxu0 %v62
  %89 = vmatpush.msra.mxu0 %v61
  %90 = vmatmul.f32.gmra.mxu0 %v72
  %v91 = vpop.f32.mrf.mxu0
  %v92 = vadd.f32 %v68, %v91
  %93 = vdwg.mxu0
  %v94 = vtanh.pop %v92
  %v95 = vld [vmem:[%s5] sm:$0xff]
  %v96 = vld [vmem:[%s5 + $0x8] sm:$0xff]
  %v97 = vld [vmem:[%s5 + $0x10] sm:$0xff]
  %v98 = vld [vmem:[%s5 + $0x18] sm:$0xff]
  %v99 = vld [vmem:[%s5 + $0x20] sm:$0xff]
  %v100 = vld [vmem:[%s6] sm:$0x1]
  %v102 = vperm.slane %v100, 0
  %v105 = vsel %vm70, %v94, 0
  %107 = vmatpush.msra.mxu0 0.0
  %108 = vmatpush.msra.mxu0 0.0
  %109 = vmatpush.msra.mxu0 0.0
  %110 = vmatpush.msra.mxu0 0.0
  %111 = vmatpush.msra.mxu0 0.0
  %112 = vmatpush.msra.mxu0 0.0
  %113 = vmatpush.msra.mxu0 0.0
  %114 = vmatpush.msra.mxu0 0.0
  %115 = vmatpush.msra.mxu0 0.0
  %116 = vmatpush.msra.mxu0 0.0
  %117 = vmatpush.msra.mxu0 0.0
  %118 = vmatpush.msra.mxu0 %v99
  %119 = vmatpush.msra.mxu0 %v98
  %120 = vmatpush.msra.mxu0 %v97
  %121 = vmatpush.msra.mxu0 %v96
  %122 = vmatpush.msra.mxu0 %v95
  %123 = vmatmul.f32.gmra.mxu0 %v105
  %v124 = vpop.f32.mrf.mxu0
  %v125 = vadd.f32 %v102, %v124
  %126 = vdwg.mxu0
  %vm127 = vcmask 15360
  %128 = vst.msk [vmem:[%s7] sm:$0xff] %vm127, %v125
  // Predicated region
  $region30: #{tpu_custom_call.1} parent=0 // pred_check
    _
  $region31: #{tpu_custom_call.1} parent=0 // pred_check_branch
    %130 = sbr.rel (0) target = $region33
  $region32: #{tpu_custom_call.1} parent=0 // pred_region
    _
  $region33: #{tpu_custom_call.1} parent=0 // pred_fallthru
    _
  // Predicated region
  $region34: #{tpu_custom_call.1} parent=0 // pred_check
    _
  $region35: #{tpu_custom_call.1} parent=0 // pred_check_branch
    %132 = sbr.rel (0) target = $region37
  $region36: #{tpu_custom_call.1} parent=0 // pred_region
    _
  $region37: #{tpu_custom_call.1} parent=0 // pred_fallthru
    _

</llo_original>
